<compile_context>
chip_gen: v5e
topology: v5e:2x2
jax: 0.10.0
libtpu: 0.0.40
codegen_flags: <defaults>
</compile_context>

<pallas_src>
import math

import jax
import jax.numpy as jnp
from jax.experimental import pallas as pl
from jax.experimental.pallas import tpu as pltpu


def _round_up(x, m):
    return (x + m - 1) // m * m


def _vmem_budget_bytes():
    """Per-kernel VMEM budget (bytes), derived from the actual chip."""
    default_cap = 64 * 1024 * 1024
    try:
        info = pltpu.get_tpu_info()
        cap = int(getattr(info, "vmem_capacity_bytes", 0)) or default_cap
    except Exception:  # not on TPU / API unavailable at trace time
        cap = default_cap
    # Leave headroom for compiler-internal scratch / pipeline bookkeeping.
    return int(cap * 3 // 4)


# ---------------------------------------------------------------------------
# Stage 1: support = X @ W   (rows of X flattened to (B*Np, Fin))
# ---------------------------------------------------------------------------
def _support_kernel(x_ref, w_ref, o_ref):
    # x_ref: (rt, Fin)   w_ref: (Fin, Fp)   o_ref: (rt, Fp)
    o_ref[...] = jnp.dot(
        x_ref[...], w_ref[...], preferred_element_type=jnp.float32
    ).astype(o_ref.dtype)


# ---------------------------------------------------------------------------
# Stage 2: output = adj @ support + bias   (row tiles outer, k innermost)
# ---------------------------------------------------------------------------
def _adj_kernel(adj_ref, sup_ref, b_ref, o_ref, acc_ref):
    # adj_ref: (1, t, t)
    # sup_ref: (1, Np, Fp) (VMEM-resident) or (1, t, Fp) (streamed k-tile)
    # b_ref:   (1, Fp) f32
    # o_ref:   (1, t, Fp)
    # acc_ref: (t, Fp) f32 scratch, persists across the k axis
    k = pl.program_id(1)
    t = o_ref.shape[1]

    @pl.when(k == 0)
    def _():
        acc_ref[...] = jnp.zeros_like(acc_ref)

    if sup_ref.shape[1] == t:
        # Streamed (or single-tile) support: the block already is the k-tile.
        sup = sup_ref[0]
    else:
        # VMEM-resident support: slice the k-th row tile out of the resident block.
        off = k * t
        if t % 128 == 0:
            off = pl.multiple_of(off, 128)
        sup = sup_ref[0, pl.ds(off, t), :]

    acc_ref[...] += jnp.dot(adj_ref[0], sup, preferred_element_type=jnp.float32)

    @pl.when(k == pl.num_programs(1) - 1)
    def _():
        o_ref[0] = (acc_ref[...] + b_ref[...].astype(jnp.float32)).astype(o_ref.dtype)


def _choose_stage2_tiling(N, Fp, adj_isz, sup_isz, out_isz, budget, max_tile):
    """Pick (t, Np, n_row, resident_support) for the adjacency GEMM."""

    def per_step_bytes(t, np_, resident):
        b = (2 * t * t * adj_isz          # adjacency tile, double-buffered
             + 2 * t * Fp * out_isz       # output tile, double-buffered
             + t * Fp * 4                 # f32 accumulator scratch
             + 2 * Fp * 4)                # bias
        b += 2 * (np_ if resident else t) * Fp * sup_isz
        return b

    cap = 2048 if max_tile is None else max_tile

    # Small graphs: a single full-dim tile per batch (no node-dim padding at all).
    if N <= min(1024, cap) and per_step_bytes(N, N, True) <= budget:
        return N, N, 1, True

    candidates = [c for c in (2048, 1024, 512, 256, 128) if c <= cap]
    best = None
    for t in candidates:
        np_ = _round_up(N, t)
        if per_step_bytes(t, np_, resident=False) > budget:
            continue
        key = (np_, -t)  # minimize padding first, then prefer the larger tile
        if best is None or key < best[0]:
            best = (key, t, np_)
    if best is None:
        t = 128
        np_ = _round_up(N, t)
    else:
        _, t, np_ = best

    resident = per_step_bytes(t, np_, resident=True) <= budget
    return t, np_, np_ // t, resident


def graph_convolution(inputs, adj_mat, weight, bias=None, *,
                      stage2_dtype=None, max_tile=None, resident_support=None):
    """Pallas implementation of GraphConvolution.forward.

    inputs:  [B, N, Fin]   adj_mat: [B, N, N]
    weight:  [Fin, Fout]   bias:    [Fout] or None
    stage2_dtype: optional compute dtype for the adjacency GEMM (e.g.
        jnp.bfloat16 — exact for 0/1 adjacency; f32 accumulation is kept).
    max_tile / resident_support: overrides for the tiling heuristics (testing).
    returns  [B, N, Fout]
    """
    B, N, Fin = inputs.shape
    Fout = weight.shape[1]
    out_dtype = inputs.dtype

    comp_dtype = (jnp.dtype(stage2_dtype) if stage2_dtype is not None
                  else jnp.dtype(jnp.float32))
    adj_isz = comp_dtype.itemsize
    sup_isz = comp_dtype.itemsize
    out_isz = jnp.dtype(out_dtype).itemsize
    x_isz = jnp.dtype(inputs.dtype).itemsize

    Fp = _round_up(Fout, 128)            # lane-dense padded feature dim
    budget = _vmem_budget_bytes()

    t, Np, n_row, resident = _choose_stage2_tiling(
        N, Fp, adj_isz, sup_isz, out_isz, budget, max_tile)
    if resident_support is not None:
        resident = bool(resident_support)

    # Exact zero padding: padded weight/bias columns and padded adjacency
    # rows/columns contribute nothing to the un-padded output region.
    w_p = weight if Fp == Fout else jnp.pad(weight, ((0, 0), (0, Fp - Fout)))
    if bias is None:
        b_p = jnp.zeros((1, Fp), jnp.float32)
    else:
        b_p = bias.reshape(1, Fout).astype(jnp.float32)
        if Fp != Fout:
            b_p = jnp.pad(b_p, ((0, 0), (0, Fp - Fout)))

    # ---- Stage 1: support = X @ W over flattened rows, with a large row tile
    x_p = inputs if Np == N else jnp.pad(inputs, ((0, 0), (0, Np - N), (0, 0)))
    x2d = x_p.reshape(B * Np, Fin)
    Mrows = B * Np
    rt = min(2048, _round_up(Mrows, 8))
    while rt > 8 and (2 * rt * Fin * x_isz + 2 * Fin * Fp * 4
                      + 2 * rt * Fp * sup_isz) > budget:
        rt = max(8, (rt // 2) // 8 * 8)
    Mrp = _round_up(Mrows, rt)
    if Mrp != Mrows:
        x2d = jnp.pad(x2d, ((0, Mrp - Mrows), (0, 0)))

    support2d = pl.pallas_call(
        _support_kernel,
        out_shape=jax.ShapeDtypeStruct((Mrp, Fp), comp_dtype),
        grid_spec=pltpu.PrefetchScalarGridSpec(
            num_scalar_prefetch=0,
            grid=(Mrp // rt,),
            in_specs=[
                pl.BlockSpec((rt, Fin), lambda i: (i, 0)),
                pl.BlockSpec((Fin, Fp), lambda i: (0, 0)),
            ],
            out_specs=pl.BlockSpec((rt, Fp), lambda i: (i, 0)),
        ),
        compiler_params=pltpu.CompilerParams(
            dimension_semantics=("parallel",),
            vmem_limit_bytes=budget,
        ),
        cost_estimate=pl.CostEstimate(
            flops=2 * Mrp * Fin * Fp,
            transcendentals=0,
            bytes_accessed=(x_isz * Mrp * Fin + 4 * Fin * Fp + sup_isz * Mrp * Fp),
        ),
    )(x2d, w_p)
    support = support2d[:Mrows].reshape(B, Np, Fp)

    # ---- Stage 2: output = adj @ support + bias (f32 accumulator) ----------
    # TODO(synk): for very large N*Fp (resident support busts VMEM and streamed
    # support dominates HBM traffic), fuse stage 1 into stage 2 by recomputing
    # the support k-tile from an X k-tile + resident W.
    adj_s2 = adj_mat
    if Np != N:
        # TODO(synk): mask the ragged tail tile in-kernel instead of padding the
        # O(N^2) adjacency; the tiling heuristic already minimizes this case.
        adj_s2 = jnp.pad(adj_s2, ((0, 0), (0, Np - N), (0, Np - N)))
    if adj_s2.dtype != comp_dtype:
        adj_s2 = adj_s2.astype(comp_dtype)

    if resident:
        sup_spec = pl.BlockSpec((1, Np, Fp), lambda bi, k: (bi // n_row, 0, 0))
    else:
        sup_spec = pl.BlockSpec((1, t, Fp), lambda bi, k: (bi // n_row, k, 0))

    out_p = pl.pallas_call(
        _adj_kernel,
        out_shape=jax.ShapeDtypeStruct((B, Np, Fp), out_dtype),
        grid_spec=pltpu.PrefetchScalarGridSpec(
            num_scalar_prefetch=0,
            # (batch, row-tile) flattened into one leading parallel axis so the
            # work shards across both TensorCores on v7x even for small B.
            grid=(B * n_row, n_row),
            in_specs=[
                pl.BlockSpec((1, t, t), lambda bi, k: (bi // n_row, bi % n_row, k)),
                sup_spec,
                pl.BlockSpec((1, Fp), lambda bi, k: (0, 0)),
            ],
            out_specs=pl.BlockSpec((1, t, Fp),
                                   lambda bi, k: (bi // n_row, bi % n_row, 0)),
            scratch_shapes=[pltpu.VMEM((t, Fp), jnp.float32)],
        ),
        compiler_params=pltpu.CompilerParams(
            dimension_semantics=("parallel", "arbitrary"),
            vmem_limit_bytes=budget,
        ),
        cost_estimate=pl.CostEstimate(
            flops=2 * B * Np * Np * Fp,
            transcendentals=0,
            bytes_accessed=(adj_isz * B * Np * Np
                            + sup_isz * B * Np * Fp * (1 if resident else n_row)
                            + out_isz * B * Np * Fp
                            + 4 * Fp),
        ),
    )(adj_s2, support, b_p)

    return out_p[:, :N, :Fout]


def _reference(inputs, adj_mat, weight, bias=None):
    out = jnp.matmul(adj_mat, jnp.matmul(inputs, weight))
    if bias is not None:
        out = out + bias
    return out


if __name__ == "__main__":
    # Module config (matches GraphConvolution(in_features, out_features, bias=True))
    in_features = 32
    out_features = 32
    B, N = 2, 16

    key = jax.random.PRNGKey(0)
    k_w, k_b, k_x, k_a, k_x2, k_a2 = jax.random.split(key, 6)

    # Deterministic param init replicating reset_parameters():
    # uniform(-stdv, stdv) with stdv = 1/sqrt(out_features)
    stdv = 1.0 / math.sqrt(out_features)
    weight = jax.random.uniform(
        k_w, (in_features, out_features), jnp.float32, minval=-stdv, maxval=stdv)
    bias = jax.random.uniform(
        k_b, (out_features,), jnp.float32, minval=-stdv, maxval=stdv)

    # Small example consistent with the module: B graphs of N nodes each.
    inputs = jax.random.normal(k_x, (B, N, in_features), jnp.float32)
    adj_mat = (jax.random.uniform(k_a, (B, N, N), jnp.float32) > 0.5).astype(jnp.float32)

    ref = _reference(inputs, adj_mat, weight, bias)
    out = jax.block_until_ready(graph_convolution(inputs, adj_mat, weight, bias))
    assert out.shape == (B, N, out_features)
    assert jnp.allclose(out, ref, atol=1e-5, rtol=1e-5), "f32 mismatch vs reference"

    # Opt-in bf16 stage-2 compute (exact for the 0/1 adjacency; support rounded).
    out_bf16 = jax.block_until_ready(
        graph_convolution(inputs, adj_mat, weight, bias, stage2_dtype=jnp.bfloat16))
    assert jnp.allclose(out_bf16, ref, atol=5e-2, rtol=5e-2), "bf16 mismatch vs reference"

    # No-bias path.
    ref_nb = _reference(inputs, adj_mat, weight, None)
    out_nb = jax.block_until_ready(graph_convolution(inputs, adj_mat, weight, None))
    assert jnp.allclose(out_nb, ref_nb, atol=1e-5, rtol=1e-5), "no-bias mismatch"

    # Exercise the multi-tile VMEM-resident-support path and the streamed
    # fallback on a modest graph by forcing a small tile (k accumulation runs).
    N2 = 256
    inputs2 = jax.random.normal(k_x2, (B, N2, in_features), jnp.float32)
    adj2 = (jax.random.uniform(k_a2, (B, N2, N2), jnp.float32) > 0.5).astype(jnp.float32)
    ref2 = _reference(inputs2, adj2, weight, bias)

    out_res = jax.block_until_ready(
        graph_convolution(inputs2, adj2, weight, bias,
                          max_tile=128, resident_support=True))
    assert jnp.allclose(out_res, ref2, atol=1e-3, rtol=1e-3), "resident path mismatch"

    out_str = jax.block_until_ready(
        graph_convolution(inputs2, adj2, weight, bias,
                          max_tile=128, resident_support=False))
    assert jnp.allclose(out_str, ref2, atol=1e-3, rtol=1e-3), "streamed path mismatch"

    print("KERNEL_OK")
</pallas_src>

<mosaic_0001>
module attributes {stable_mosaic.version = 11 : i64} {
  func.func @_support_kernel(%arg0: i32, %arg1: memref<32x32xf32, #tpu.memory_space<vmem>>, %arg2: memref<32x128xf32, #tpu.memory_space<vmem>>, %arg3: memref<32x128xf32, #tpu.memory_space<vmem>>) attributes {dimension_semantics = [#tpu.dimension_semantics<parallel>], iteration_bounds = array<i64: 1>, scalar_prefetch = 0 : i64, scratch_operands = 0 : i64, tpu.core_type = #tpu.core_type<tc>, window_params = [{transform_indices = @transform_0, window_bounds = array<i64: 32, 32>}, {pipeline_mode = #tpu.pipeline_mode<synchronous>, transform_indices = @transform_1, window_bounds = array<i64: 32, 128>}, {transform_indices = @transform_2, window_bounds = array<i64: 32, 128>}]} {
    %c0 = arith.constant 0 : index
    %c0_0 = arith.constant 0 : index
    %0 = vector.load %arg1[%c0, %c0_0] : memref<32x32xf32, #tpu.memory_space<vmem>>, vector<32x32xf32>
    %c0_1 = arith.constant 0 : index
    %c0_2 = arith.constant 0 : index
    %1 = vector.load %arg2[%c0_1, %c0_2] : memref<32x128xf32, #tpu.memory_space<vmem>>, vector<32x128xf32>
    %cst = arith.constant dense<0.000000e+00> : vector<32x128xf32>
    %2 = tpu.matmul %0, %1, %cst {dimension_numbers = #tpu.dot_dimension_numbers<[1], [0], [0], [1], [0, 0, 1, 1], [], []>} : vector<32x32xf32>, vector<32x128xf32>, vector<32x128xf32> -> vector<32x128xf32>
    %c0_3 = arith.constant 0 : index
    %c0_4 = arith.constant 0 : index
    %3 = vector.load %arg3[%c0_3, %c0_4] : memref<32x128xf32, #tpu.memory_space<vmem>>, vector<32x128xf32>
    tpu.vector_store %arg3[%c0_3, %c0_4], %2 {strides = array<i32>} : memref<32x128xf32, #tpu.memory_space<vmem>>, vector<32x128xf32>,
    return
  }
  func.func @transform_0(%arg0: i32) -> (i32, i32) {
    %c0_i32 = arith.constant 0 : i32
    %c0_i32_0 = arith.constant 0 : i32
    return %arg0, %c0_i32 : i32, i32
  }
  func.func @transform_1(%arg0: i32) -> (i32, i32) {
    %c0_i32 = arith.constant 0 : i32
    %c0_i32_0 = arith.constant 0 : i32
    %c0_i32_1 = arith.constant 0 : i32
    return %c0_i32, %c0_i32_0 : i32, i32
  }
  func.func @transform_2(%arg0: i32) -> (i32, i32) {
    %c0_i32 = arith.constant 0 : i32
    %c0_i32_0 = arith.constant 0 : i32
    return %arg0, %c0_i32 : i32, i32
  }
}

</mosaic_0001>

<llo_original>
// kernel: tpu_custom_call.1
$region0: #{tpu_custom_call.1}
  #allocation0 [shape = 'u32[]', space=smem, size = 0x4, offset = 0x4, fixed_abs, tag = 'smem constant byte address 0x4 - core index']
  #allocation1 [shape = 'u32[72,128]{1,0:T(1,128)}', space=vmem, size = 0x9000, scoped, tag = 'internal scratch']
  %s0 = inlined_call_operand.hbm [shape: f32[32,32], index: 0, kind: input, shape index: {}]
  %s1 = inlined_call_operand.hbm [shape: f32[32,128], index: 1, kind: input, shape index: {}]
  %s2 = inlined_call_operand.hbm [shape: f32[32,128], index: 2, kind: output, shape index: {}]
  %s3 = sld [smem:[#allocation0]]
  $region26: #{tpu_custom_call.1} parent=0
    _
  %s5 = ssub.s32 1, %s3
  %s6 = scalar_select 0, %s5, %s3
  $region1: #{tpu_custom_call.1} parent=0
    #allocation2 [shape = 'u8[16384]{0}', space=vmem, size = 0x4000, scoped, tag = 'input window, operand 0, single buffered']
    #allocation3 [shape = 's32[1]{0}', space=sflag, size = 0x4, scoped, tag = 'scoped memory for tpu_custom_call.1']
    #allocation4 [shape = 's32[1]{0}', space=sflag, size = 0x4, scoped, tag = 'scoped memory for tpu_custom_call.1']
    #allocation5 [shape = 'u8[16384]{0}', space=vmem, size = 0x4000, scoped, tag = 'input window, operand 1, single buffered']
    #allocation6 [shape = 's32[1]{0}', space=sflag, size = 0x4, scoped, tag = 'scoped memory for tpu_custom_call.1']
    #allocation7 [shape = 'u8[16384]{0}', space=vmem, size = 0x4000, scoped, tag = 'output window, operand 0, single buffered']
    %7 = vsyncpa [#allocation3], 0
    %8 = vsyncpa [#allocation6], 0
    %9 = vsyncpa [#allocation4], 0
    // Predicated region
    $region2: #{tpu_custom_call.1} parent=1 // pred_check
      _
    $region3: #{tpu_custom_call.1} parent=1 // pred_check_branch
      %11 = sbr.rel (0) target = $region5
    $region4: #{tpu_custom_call.1} parent=1 // pred_region
      %13 = vsyncadd [#allocation3], 0
      %s14 = sshll.u32 %s0, 4
      %s15 = int_to_ptr.hbm [resolvable:$true] %s14
      %s16 = sshll.u32 [#allocation2], 4
      %s17 = int_to_ptr.vmem [resolvable:$true] %s16
      %22 = dma.hbm_to_vmem [thread:$0]  %s15, 512, %s17, [#allocation3], 128, 128, 8
    $region5: #{tpu_custom_call.1} parent=1 // pred_fallthru
      _
    // Predicated region
    $region6: #{tpu_custom_call.1} parent=1 // pred_check
      _
    $region7: #{tpu_custom_call.1} parent=1 // pred_check_branch
      %24 = sbr.rel (0) target = $region9
    $region8: #{tpu_custom_call.1} parent=1 // pred_region
      %26 = vsyncadd [#allocation6], 0
      %s27 = sshll.u32 %s1, 4
      %s28 = int_to_ptr.hbm [resolvable:$true] %s27
      %s29 = sshll.u32 [#allocation5], 4
      %s30 = int_to_ptr.vmem [resolvable:$true] %s29
      %35 = dma.hbm_to_vmem [thread:$0]  %s28, 512, %s30, [#allocation6], 128, 128, 8
    $region9: #{tpu_custom_call.1} parent=1 // pred_fallthru
      _
    // Predicated region
    $region10: #{tpu_custom_call.1} parent=1 // pred_check
      _
    $region11: #{tpu_custom_call.1} parent=1 // pred_check_branch
      %37 = sbr.rel (0) target = $region13
    $region12: #{tpu_custom_call.1} parent=1 // pred_region
      %39 = dma.done [#allocation3], 512
    $region13: #{tpu_custom_call.1} parent=1 // pred_fallthru
      _
    // Predicated region
    $region14: #{tpu_custom_call.1} parent=1 // pred_check
      _
    $region15: #{tpu_custom_call.1} parent=1 // pred_check_branch
      %41 = sbr.rel (0) target = $region17
    $region16: #{tpu_custom_call.1} parent=1 // pred_region
      %43 = dma.done [#allocation6], 512
    $region17: #{tpu_custom_call.1} parent=1 // pred_fallthru
      _
    %v44 = vld [vmem:[#allocation2] sm:$0xff]
    %v45 = vld [vmem:[#allocation2 + $0x8] sm:$0xff]
    %v46 = vld [vmem:[#allocation2 + $0x10] sm:$0xff]
    %v47 = vld [vmem:[#allocation2 + $0x18] sm:$0xff]
    %v48 = vld [vmem:[#allocation5] sm:$0xff]
    %v49 = vld [vmem:[#allocation5 + $0x8] sm:$0xff]
    %v50 = vld [vmem:[#allocation5 + $0x10] sm:$0xff]
    %v51 = vld [vmem:[#allocation5 + $0x18] sm:$0xff]
    %vm52 = vcmask 261120
    %v54 = vsel %vm52, %v44, 0
    %v57 = vsel %vm52, %v45, 0
    %v60 = vsel %vm52, %v46, 0
    %v63 = vsel %vm52, %v47, 0
    %65 = vmatpush.msra.mxu0 0.0
    %66 = vmatpush.msra.mxu0 0.0
    %67 = vmatpush.msra.mxu0 0.0
    %68 = vmatpush.msra.mxu0 0.0
    %69 = vmatpush.msra.mxu0 0.0
    %70 = vmatpush.msra.mxu0 0.0
    %71 = vmatpush.msra.mxu0 0.0
    %72 = vmatpush.msra.mxu0 0.0
    %73 = vmatpush.msra.mxu0 0.0
    %74 = vmatpush.msra.mxu0 0.0
    %75 = vmatpush.msra.mxu0 0.0
    %76 = vmatpush.msra.mxu0 0.0
    %77 = vmatpush.msra.mxu0 %v51
    %78 = vmatpush.msra.mxu0 %v50
    %79 = vmatpush.msra.mxu0 %v49
    %80 = vmatpush.msra.mxu0 %v48
    %81 = vmatmul.f32.gmra.mxu0 %v54
    %v82 = vpop.f32.mrf.mxu0
    %v83 = vadd.f32 0.0, %v82
    %84 = vmatmul.f32.gmra.mxu0 %v57
    %v85 = vpop.f32.mrf.mxu0
    %v86 = vadd.f32 0.0, %v85
    %87 = vmatmul.f32.gmra.mxu0 %v60
    %v88 = vpop.f32.mrf.mxu0
    %v89 = vadd.f32 0.0, %v88
    %90 = vmatmul.f32.gmra.mxu0 %v63
    %v91 = vpop.f32.mrf.mxu0
    %v92 = vadd.f32 0.0, %v91
    %93 = vdwg.mxu0
    %94 = vst [vmem:[#allocation7] sm:$0xff] %v83
    %95 = vst [vmem:[#allocation7 + $0x8] sm:$0xff] %v86
    %96 = vst [vmem:[#allocation7 + $0x10] sm:$0xff] %v89
    %97 = vst [vmem:[#allocation7 + $0x18] sm:$0xff] %v92
    // Predicated region
    $region18: #{tpu_custom_call.1} parent=1 // pred_check
      _
    $region19: #{tpu_custom_call.1} parent=1 // pred_check_branch
      %99 = sbr.rel (0) target = $region21
    $region20: #{tpu_custom_call.1} parent=1 // pred_region
      %101 = vsyncadd [#allocation4], 0
      %s102 = sshll.u32 [#allocation7], 4
      %s103 = int_to_ptr.vmem [resolvable:$true] %s102
      %s104 = sshll.u32 %s2, 4
      %s105 = int_to_ptr.hbm [resolvable:$true] %s104
      %110 = dma.vmem_to_hbm [thread:$0]  %s103, 512, %s105, [#allocation4], 128, 128, 8
    $region21: #{tpu_custom_call.1} parent=1 // pred_fallthru
      _
    // Predicated region
    $region22: #{tpu_custom_call.1} parent=1 // pred_check
      _
    $region23: #{tpu_custom_call.1} parent=1 // pred_check_branch
      %112 = sbr.rel (0) target = $region25
    $region24: #{tpu_custom_call.1} parent=1 // pred_region
      %114 = dma.done [#allocation4], 512
    $region25: #{tpu_custom_call.1} parent=1 // pred_fallthru
      _
    %115 = vsyncpa [#allocation3], 1
    %116 = vsyncpa [#allocation6], 1
    %117 = vsyncpa [#allocation4], 1

</llo_original>
